<compile_context>
chip_gen: v7x
topology: tpu7x:2x2x1
jax: 0.10.0
libtpu: 0.0.40
codegen_flags: <defaults>
</compile_context>

<pallas_src>
import jax
import jax.numpy as jnp
from jax.experimental import pallas as pl
from jax.experimental.pallas import tpu as pltpu

EPS = 1e-5
HPAD = 128                 # lane-dense padded hidden width for layers 2/3 + output row
_SUB = 16                  # batch-row alignment (bf16 sublane packing)
_MIN_ROWS_PER_CORE = 512   # only force nb>=2 (v7x 2-TC sharding) when tiles stay >= this


def churn_kernel(x_ref,
                 w1_ref, c1_ref,
                 w2_ref, c2_ref,
                 w3_ref, c3_ref,
                 w4_ref, b4_ref,
                 o_ref):
    """Fused ChurnNet forward on one batch tile.

    3x (Linear with BN-scale folded into W, shift c, ReLU) + final Linear done as a
    VPU multiply + XLU lane reduce.  Matmuls run bf16 x bf16 -> f32 on the MXU;
    elementwise math stays f32.
    """
    h = x_ref[...]  # [Bt, IN] bf16 (cast in the wrapper)

    # layer1 + folded bn1 + relu   (dropout1 identity in eval mode)
    h = jnp.dot(h, w1_ref[...], preferred_element_type=jnp.float32)
    h = jnp.maximum(h + c1_ref[...], 0.0)

    # layer2 + folded bn2 + relu   (dropout2 identity in eval mode)
    h = jnp.dot(h.astype(jnp.bfloat16), w2_ref[...],
                preferred_element_type=jnp.float32)
    h = jnp.maximum(h + c2_ref[...], 0.0)

    # layer3 + folded bn3 + relu   (dropout3 identity in eval mode)
    h = jnp.dot(h.astype(jnp.bfloat16), w3_ref[...],
                preferred_element_type=jnp.float32)
    h = jnp.maximum(h + c3_ref[...], 0.0)

    # output layer (out_features=1): VPU multiply + lane reduction instead of an
    # N=1 MXU pass.  w4_ref is the padded [1, 128] weight row, b4_ref is [1, 1].
    out = jnp.sum(h * w4_ref[...], axis=-1, keepdims=True) + b4_ref[...]
    o_ref[...] = out.astype(o_ref.dtype)


def _round_up(x, m):
    return (x + m - 1) // m * m


def churn_net_forward(x, kernel_params, *, block_batch=1024):
    """x: [B, input_size] float32 -> [B, 1] float32."""
    w1, c1, w2, c2, w3, c3, w4r, b4 = kernel_params
    B, IN = x.shape

    # Batch tile: up to `block_batch` rows (MXU M dim), aligned to 16 rows (bf16).
    B16 = _round_up(B, _SUB)
    Bt = min(block_batch, B16)
    # v7x has 2 TensorCores sharding the "parallel" batch axis: when the batch is
    # large enough, cap Bt so the grid keeps at least 2 steps (nb >= 2).
    if B16 >= 2 * _MIN_ROWS_PER_CORE:
        Bt = min(Bt, _round_up(B16 // 2, _SUB))

    Bp = _round_up(B, Bt)
    nb = Bp // Bt

    # Halve the dominant HBM stream: the kernel truncates x to bf16 before the MXU
    # anyway, so casting here is numerically identical.
    x = x.astype(jnp.bfloat16)
    if Bp != B:
        x = jnp.pad(x, ((0, Bp - B), (0, 0)))

    H1 = w1.shape[1]   # 128
    HP = w2.shape[1]   # 128 (padded)

    flops = 2 * Bp * (IN * H1 + H1 * HP + HP * HP + HP)
    bytes_accessed = (x.size * 2                                   # bf16 x read
                      + Bp * 4                                     # f32 output write
                      + (w1.size + w2.size + w3.size) * 2          # bf16 weights
                      + (c1.size + c2.size + c3.size + w4r.size + b4.size) * 4)

    def resident(shape):
        # Same block index every grid step -> operand stays put in VMEM.
        return pl.BlockSpec(shape, lambda i: (0,) * len(shape))

    out = pl.pallas_call(
        churn_kernel,
        out_shape=jax.ShapeDtypeStruct((Bp, 1), jnp.float32),
        grid=(nb,),
        in_specs=[
            pl.BlockSpec((Bt, IN), lambda i: (i, 0)),   # x: tiled & pipelined on batch
            resident(w1.shape), resident(c1.shape),
            resident(w2.shape), resident(c2.shape),
            resident(w3.shape), resident(c3.shape),
            resident(w4r.shape), resident(b4.shape),
        ],
        out_specs=pl.BlockSpec((Bt, 1), lambda i: (i, 0)),
        compiler_params=pltpu.CompilerParams(
            dimension_semantics=("parallel",),          # shards batch tiles on v7x's 2 TCs
            vmem_limit_bytes=32 * 1024 * 1024),
        cost_estimate=pl.CostEstimate(flops=flops, transcendentals=0,
                                      bytes_accessed=bytes_accessed),
    )(x, w1, c1, w2, c2, w3, c3, w4r, b4)
    return out[:B]


def _linear_init(key, fan_in, fan_out):
    """PyTorch nn.Linear default init: U(-1/sqrt(fan_in), 1/sqrt(fan_in))."""
    kw, kb = jax.random.split(key)
    bound = 1.0 / jnp.sqrt(float(fan_in))
    # stored as [in, out] so the kernel computes x @ W
    w = jax.random.uniform(kw, (fan_in, fan_out), jnp.float32, -bound, bound)
    b = jax.random.uniform(kb, (fan_out,), jnp.float32, -bound, bound)
    return w, b


def make_params(key, input_size):
    """Build raw (PyTorch-equivalent) params and the folded/padded kernel params."""
    k1, k2, k3, k4 = jax.random.split(key, 4)
    w1, b1 = _linear_init(k1, input_size, 128)
    w2, b2 = _linear_init(k2, 128, 64)
    w3, b3 = _linear_init(k3, 64, 32)
    w4, b4 = _linear_init(k4, 32, 1)

    # BatchNorm1d params at deterministic PyTorch defaults (eval mode):
    # gamma=1, beta=0, running_mean=0, running_var=1.
    def bn_default(n):
        return (jnp.ones((n,), jnp.float32), jnp.zeros((n,), jnp.float32),
                jnp.zeros((n,), jnp.float32), jnp.ones((n,), jnp.float32))

    bn1, bn2, bn3 = bn_default(128), bn_default(64), bn_default(32)
    raw = dict(w1=w1, b1=b1, bn1=bn1, w2=w2, b2=b2, bn2=bn2,
               w3=w3, b3=b3, bn3=bn3, w4=w4, b4=b4)

    # Fold BN(eval) into the weight columns + a per-feature shift:
    #   y = relu((x @ (W * s)) + c),   s = gamma/sqrt(var+eps),  c = b*s + beta - mean*s
    def fold(w, b, bn):
        gamma, beta, mean, var = bn
        s = gamma / jnp.sqrt(var + EPS)
        c = b * s + beta - mean * s
        return w * s[None, :], c[None, :]

    w1f, c1 = fold(w1, b1, bn1)
    w2f, c2 = fold(w2, b2, bn2)
    w3f, c3 = fold(w3, b3, bn3)

    # Zero-pad hidden dims 64->128 and 32->128 so intermediates are lane-dense.
    w2f = jnp.pad(w2f, ((0, 0), (0, HPAD - w2f.shape[1])))
    c2 = jnp.pad(c2, ((0, 0), (0, HPAD - c2.shape[1])))
    w3f = jnp.pad(w3f, ((0, HPAD - w3f.shape[0]), (0, HPAD - w3f.shape[1])))
    c3 = jnp.pad(c3, ((0, 0), (0, HPAD - c3.shape[1])))
    w4r = jnp.pad(w4.T, ((0, 0), (0, HPAD - w4.shape[0])))   # [1, 128] f32 row

    kernel_params = (w1f.astype(jnp.bfloat16), c1,
                     w2f.astype(jnp.bfloat16), c2,
                     w3f.astype(jnp.bfloat16), c3,
                     w4r, b4[None, :])
    return kernel_params, raw


def reference_matched(x, kernel_params):
    """Pure-JAX reference with the SAME folded/padded/bf16 math as the kernel."""
    w1, c1, w2, c2, w3, c3, w4r, b4 = kernel_params
    h = jnp.maximum(jnp.dot(x.astype(jnp.bfloat16), w1,
                            preferred_element_type=jnp.float32) + c1, 0.0)
    h = jnp.maximum(jnp.dot(h.astype(jnp.bfloat16), w2,
                            preferred_element_type=jnp.float32) + c2, 0.0)
    h = jnp.maximum(jnp.dot(h.astype(jnp.bfloat16), w3,
                            preferred_element_type=jnp.float32) + c3, 0.0)
    return jnp.sum(h * w4r, axis=-1, keepdims=True) + b4


def reference_pytorch(x, raw):
    """Exact f32 eval-mode PyTorch semantics (Linear -> BN -> ReLU, dropout=identity)."""
    def bn(h, params):
        gamma, beta, mean, var = params
        return (h - mean) / jnp.sqrt(var + EPS) * gamma + beta

    h = jnp.maximum(bn(x @ raw["w1"] + raw["b1"], raw["bn1"]), 0.0)
    h = jnp.maximum(bn(h @ raw["w2"] + raw["b2"], raw["bn2"]), 0.0)
    h = jnp.maximum(bn(h @ raw["w3"] + raw["b3"], raw["bn3"]), 0.0)
    return h @ raw["w4"] + raw["b4"]


if __name__ == "__main__":
    key = jax.random.PRNGKey(0)
    kx, kp = jax.random.split(key)

    input_size = 16  # small, consistent with tabular churn features
    kernel_params, raw = make_params(kp, input_size)

    # Small batch (not a multiple of 16 -> exercises the padding path, grid=(1,)).
    x_small = jax.random.normal(kx, (40, input_size), jnp.float32)
    out_small = jax.block_until_ready(churn_net_forward(x_small, kernel_params))
    assert out_small.shape == (40, 1)

    # Larger batch: exercises the nb>=2 cap (2000 rows -> 2 tiles of 1008) and padding.
    x_big = jax.random.normal(kx, (2000, input_size), jnp.float32)
    out_big = jax.block_until_ready(churn_net_forward(x_big, kernel_params))
    assert out_big.shape == (2000, 1)

    for x, out in ((x_small, out_small), (x_big, out_big)):
        ref_m = reference_matched(x, kernel_params)
        ref_t = reference_pytorch(x, raw)
        assert jnp.allclose(out, ref_m, atol=1e-3, rtol=1e-3), "mismatch vs matched ref"
        assert jnp.allclose(out, ref_t, atol=5e-2, rtol=5e-2), "mismatch vs f32 PyTorch ref"

    print("KERNEL_OK")
</pallas_src>

<mosaic_0001>
module attributes {stable_mosaic.version = 11 : i64} {
  func.func @churn_kernel(%arg0: i32, %arg1: memref<48x16xbf16, #tpu.memory_space<vmem>>, %arg2: memref<16x128xbf16, #tpu.memory_space<vmem>>, %arg3: memref<1x128xf32, #tpu.memory_space<vmem>>, %arg4: memref<128x128xbf16, #tpu.memory_space<vmem>>, %arg5: memref<1x128xf32, #tpu.memory_space<vmem>>, %arg6: memref<128x128xbf16, #tpu.memory_space<vmem>>, %arg7: memref<1x128xf32, #tpu.memory_space<vmem>>, %arg8: memref<1x128xf32, #tpu.memory_space<vmem>>, %arg9: memref<1x1xf32, #tpu.memory_space<vmem>>, %arg10: memref<48x1xf32, #tpu.memory_space<vmem>>) attributes {dimension_semantics = [#tpu.dimension_semantics<parallel>], iteration_bounds = array<i64: 1>, scalar_prefetch = 0 : i64, scratch_operands = 0 : i64, tpu.core_type = #tpu.core_type<tc>, window_params = [{transform_indices = @transform_0, window_bounds = array<i64: 48, 16>}, {pipeline_mode = #tpu.pipeline_mode<synchronous>, transform_indices = @transform_1, window_bounds = array<i64: 16, 128>}, {pipeline_mode = #tpu.pipeline_mode<synchronous>, transform_indices = @transform_2, window_bounds = array<i64: 1, 128>}, {pipeline_mode = #tpu.pipeline_mode<synchronous>, transform_indices = @transform_3, window_bounds = array<i64: 128, 128>}, {pipeline_mode = #tpu.pipeline_mode<synchronous>, transform_indices = @transform_4, window_bounds = array<i64: 1, 128>}, {pipeline_mode = #tpu.pipeline_mode<synchronous>, transform_indices = @transform_5, window_bounds = array<i64: 128, 128>}, {pipeline_mode = #tpu.pipeline_mode<synchronous>, transform_indices = @transform_6, window_bounds = array<i64: 1, 128>}, {pipeline_mode = #tpu.pipeline_mode<synchronous>, transform_indices = @transform_7, window_bounds = array<i64: 1, 128>}, {pipeline_mode = #tpu.pipeline_mode<synchronous>, transform_indices = @transform_8, window_bounds = array<i64: 1, 1>}, {transform_indices = @transform_9, window_bounds = array<i64: 48, 1>}]} {
    %c0 = arith.constant 0 : index
    %c0_0 = arith.constant 0 : index
    %0 = vector.load %arg1[%c0, %c0_0] : memref<48x16xbf16, #tpu.memory_space<vmem>>, vector<48x16xbf16>
    %c0_1 = arith.constant 0 : index
    %c0_2 = arith.constant 0 : index
    %1 = vector.load %arg2[%c0_1, %c0_2] : memref<16x128xbf16, #tpu.memory_space<vmem>>, vector<16x128xbf16>
    %cst = arith.constant dense<0.000000e+00> : vector<48x128xf32>
    %2 = tpu.matmul %0, %1, %cst {dimension_numbers = #tpu.dot_dimension_numbers<[1], [0], [0], [1], [0, 0, 1, 1], [], []>} : vector<48x16xbf16>, vector<16x128xbf16>, vector<48x128xf32> -> vector<48x128xf32>
    %c0_3 = arith.constant 0 : index
    %c0_4 = arith.constant 0 : index
    %3 = vector.load %arg3[%c0_3, %c0_4] : memref<1x128xf32, #tpu.memory_space<vmem>>, vector<1x128xf32>
    %4 = vector.broadcast %3 : vector<1x128xf32> to vector<48x128xf32>
    %5 = arith.addf %2, %4 : vector<48x128xf32>
    %cst_5 = arith.constant 0.000000e+00 : f32
    %6 = vector.broadcast %cst_5 : f32 to vector<48x128xf32>
    %7 = arith.maximumf %5, %6 : vector<48x128xf32>
    %8 = arith.truncf %7 : vector<48x128xf32> to vector<48x128xbf16>
    %c0_6 = arith.constant 0 : index
    %c0_7 = arith.constant 0 : index
    %9 = vector.load %arg4[%c0_6, %c0_7] : memref<128x128xbf16, #tpu.memory_space<vmem>>, vector<128x128xbf16>
    %cst_8 = arith.constant dense<0.000000e+00> : vector<48x128xf32>
    %10 = tpu.matmul %8, %9, %cst_8 {dimension_numbers = #tpu.dot_dimension_numbers<[1], [0], [0], [1], [0, 0, 1, 1], [], []>} : vector<48x128xbf16>, vector<128x128xbf16>, vector<48x128xf32> -> vector<48x128xf32>
    %c0_9 = arith.constant 0 : index
    %c0_10 = arith.constant 0 : index
    %11 = vector.load %arg5[%c0_9, %c0_10] : memref<1x128xf32, #tpu.memory_space<vmem>>, vector<1x128xf32>
    %12 = vector.broadcast %11 : vector<1x128xf32> to vector<48x128xf32>
    %13 = arith.addf %10, %12 : vector<48x128xf32>
    %cst_11 = arith.constant 0.000000e+00 : f32
    %14 = vector.broadcast %cst_11 : f32 to vector<48x128xf32>
    %15 = arith.maximumf %13, %14 : vector<48x128xf32>
    %16 = arith.truncf %15 : vector<48x128xf32> to vector<48x128xbf16>
    %c0_12 = arith.constant 0 : index
    %c0_13 = arith.constant 0 : index
    %17 = vector.load %arg6[%c0_12, %c0_13] : memref<128x128xbf16, #tpu.memory_space<vmem>>, vector<128x128xbf16>
    %cst_14 = arith.constant dense<0.000000e+00> : vector<48x128xf32>
    %18 = tpu.matmul %16, %17, %cst_14 {dimension_numbers = #tpu.dot_dimension_numbers<[1], [0], [0], [1], [0, 0, 1, 1], [], []>} : vector<48x128xbf16>, vector<128x128xbf16>, vector<48x128xf32> -> vector<48x128xf32>
    %c0_15 = arith.constant 0 : index
    %c0_16 = arith.constant 0 : index
    %19 = vector.load %arg7[%c0_15, %c0_16] : memref<1x128xf32, #tpu.memory_space<vmem>>, vector<1x128xf32>
    %20 = vector.broadcast %19 : vector<1x128xf32> to vector<48x128xf32>
    %21 = arith.addf %18, %20 : vector<48x128xf32>
    %cst_17 = arith.constant 0.000000e+00 : f32
    %22 = vector.broadcast %cst_17 : f32 to vector<48x128xf32>
    %23 = arith.maximumf %21, %22 : vector<48x128xf32>
    %c0_18 = arith.constant 0 : index
    %c0_19 = arith.constant 0 : index
    %24 = vector.load %arg8[%c0_18, %c0_19] : memref<1x128xf32, #tpu.memory_space<vmem>>, vector<1x128xf32>
    %25 = vector.broadcast %24 : vector<1x128xf32> to vector<48x128xf32>
    %26 = arith.mulf %23, %25 : vector<48x128xf32>
    %cst_20 = arith.constant dense<0.000000e+00> : vector<48xf32>
    %27 = vector.multi_reduction <add>, %26, %cst_20 [1] : vector<48x128xf32> to vector<48xf32>
    %28 = vector.shape_cast %27 : vector<48xf32> to vector<48x1xf32>
    %c0_21 = arith.constant 0 : index
    %c0_22 = arith.constant 0 : index
    %29 = vector.load %arg9[%c0_21, %c0_22] : memref<1x1xf32, #tpu.memory_space<vmem>>, vector<1x1xf32>
    %30 = vector.broadcast %29 : vector<1x1xf32> to vector<48x1xf32>
    %31 = arith.addf %28, %30 : vector<48x1xf32>
    %c0_23 = arith.constant 0 : index
    %c0_24 = arith.constant 0 : index
    %32 = vector.load %arg10[%c0_23, %c0_24] : memref<48x1xf32, #tpu.memory_space<vmem>>, vector<48x1xf32>
    tpu.vector_store %arg10[%c0_23, %c0_24], %31 {strides = array<i32>} : memref<48x1xf32, #tpu.memory_space<vmem>>, vector<48x1xf32>,
    return
  }
  func.func @transform_0(%arg0: i32) -> (i32, i32) {
    %c0_i32 = arith.constant 0 : i32
    %c0_i32_0 = arith.constant 0 : i32
    return %arg0, %c0_i32 : i32, i32
  }
  func.func @transform_1(%arg0: i32) -> (i32, i32) {
    %c0_i32 = arith.constant 0 : i32
    %c0_i32_0 = arith.constant 0 : i32
    %c0_i32_1 = arith.constant 0 : i32
    return %c0_i32, %c0_i32_0 : i32, i32
  }
  func.func @transform_2(%arg0: i32) -> (i32, i32) {
    %c0_i32 = arith.constant 0 : i32
    %c0_i32_0 = arith.constant 0 : i32
    %c0_i32_1 = arith.constant 0 : i32
    return %c0_i32, %c0_i32_0 : i32, i32
  }
  func.func @transform_3(%arg0: i32) -> (i32, i32) {
    %c0_i32 = arith.constant 0 : i32
    %c0_i32_0 = arith.constant 0 : i32
    %c0_i32_1 = arith.constant 0 : i32
    return %c0_i32, %c0_i32_0 : i32, i32
  }
  func.func @transform_4(%arg0: i32) -> (i32, i32) {
    %c0_i32 = arith.constant 0 : i32
    %c0_i32_0 = arith.constant 0 : i32
    %c0_i32_1 = arith.constant 0 : i32
    return %c0_i32, %c0_i32_0 : i32, i32
  }
  func.func @transform_5(%arg0: i32) -> (i32, i32) {
    %c0_i32 = arith.constant 0 : i32
    %c0_i32_0 = arith.constant 0 : i32
    %c0_i32_1 = arith.constant 0 : i32
    return %c0_i32, %c0_i32_0 : i32, i32
  }
  func.func @transform_6(%arg0: i32) -> (i32, i32) {
    %c0_i32 = arith.constant 0 : i32
    %c0_i32_0 = arith.constant 0 : i32
    %c0_i32_1 = arith.constant 0 : i32
    return %c0_i32, %c0_i32_0 : i32, i32
  }
  func.func @transform_7(%arg0: i32) -> (i32, i32) {
    %c0_i32 = arith.constant 0 : i32
    %c0_i32_0 = arith.constant 0 : i32
    %c0_i32_1 = arith.constant 0 : i32
    return %c0_i32, %c0_i32_0 : i32, i32
  }
  func.func @transform_8(%arg0: i32) -> (i32, i32) {
    %c0_i32 = arith.constant 0 : i32
    %c0_i32_0 = arith.constant 0 : i32
    %c0_i32_1 = arith.constant 0 : i32
    return %c0_i32, %c0_i32_0 : i32, i32
  }
  func.func @transform_9(%arg0: i32) -> (i32, i32) {
    %c0_i32 = arith.constant 0 : i32
    %c0_i32_0 = arith.constant 0 : i32
    return %arg0, %c0_i32 : i32, i32
  }
}

</mosaic_0001>

<llo_original>
// kernel: tpu_custom_call.1
$region0: #{tpu_custom_call.1}
  #allocation0 [shape = 'u32[]', space=smem, size = 0x4, offset = 0x4, fixed_abs, tag = 'smem constant byte address 0x4 - core index']
  #allocation1 [shape = 'u32[144,128]{1,0:T(1,128)}', space=vmem, size = 0x12000, scoped, tag = 'internal scratch']
  #allocation2 [shape = 'f32[1,1]{1,0:T(1,128)S(1)}', space=vmem, size = 0x200, scoped, tag = 'scoped memory for tpu_custom_call.1']
  %s0 = inlined_call_operand.vmem [shape: bf16[48,16], index: 0, kind: input, shape index: {}]
  %s1 = inlined_call_operand.vmem [shape: bf16[16,128], index: 1, kind: input, shape index: {}]
  %s2 = inlined_call_operand.vmem [shape: f32[1,128], index: 2, kind: input, shape index: {}]
  %s3 = inlined_call_operand.hbm [shape: bf16[128,128], index: 3, kind: input, shape index: {}]
  %s4 = inlined_call_operand.vmem [shape: f32[1,128], index: 4, kind: input, shape index: {}]
  %s5 = inlined_call_operand.hbm [shape: bf16[128,128], index: 5, kind: input, shape index: {}]
  %s6 = inlined_call_operand.vmem [shape: f32[1,128], index: 6, kind: input, shape index: {}]
  %s7 = inlined_call_operand.vmem [shape: f32[1,128], index: 7, kind: input, shape index: {}]
  %s8 = inlined_call_operand.<no memory space> [shape: f32[1,1], index: 8, kind: input, shape index: {}]
  %s9 = inlined_call_operand.vmem [shape: f32[48,1], index: 9, kind: output, shape index: {}]
  %s10 = sld [smem:[#allocation0]]
  $region54: #{tpu_custom_call.1} parent=0
    _
  %s12 = ssub.s32 1, %s10
  %s13 = scalar_select 0, %s12, %s10
  %v14 = vstv %s8
  %15 = vst [vmem:[#allocation2] sm:$0x1] %v14
  $region1: #{tpu_custom_call.1} parent=0
    #allocation3 [shape = 'u8[32768]{0}', space=vmem, size = 0x8000, scoped, tag = 'input window, operand 3, single buffered']
    #allocation4 [shape = 's32[1]{0}', space=sflag, size = 0x4, scoped, tag = 'scoped memory for tpu_custom_call.1']
    #allocation5 [shape = 'u8[32768]{0}', space=vmem, size = 0x8000, scoped, tag = 'input window, operand 5, single buffered']
    #allocation6 [shape = 's32[1]{0}', space=sflag, size = 0x4, scoped, tag = 'scoped memory for tpu_custom_call.1']
    %16 = vsyncpa [#allocation4], 0
    %17 = vsyncpa [#allocation6], 0
    // Predicated region
    $region2: #{tpu_custom_call.1} parent=1 // pred_check
      _
    $region3: #{tpu_custom_call.1} parent=1 // pred_check_branch
      %19 = sbr.rel (0) target = $region5
    $region4: #{tpu_custom_call.1} parent=1 // pred_region
      _
    $region5: #{tpu_custom_call.1} parent=1 // pred_fallthru
      _
    // Predicated region
    $region6: #{tpu_custom_call.1} parent=1 // pred_check
      _
    $region7: #{tpu_custom_call.1} parent=1 // pred_check_branch
      %21 = sbr.rel (0) target = $region9
    $region8: #{tpu_custom_call.1} parent=1 // pred_region
      _
    $region9: #{tpu_custom_call.1} parent=1 // pred_fallthru
      _
    // Predicated region
    $region10: #{tpu_custom_call.1} parent=1 // pred_check
      _
    $region11: #{tpu_custom_call.1} parent=1 // pred_check_branch
      %23 = sbr.rel (0) target = $region13
    $region12: #{tpu_custom_call.1} parent=1 // pred_region
      _
    $region13: #{tpu_custom_call.1} parent=1 // pred_fallthru
      _
    // Predicated region
    $region14: #{tpu_custom_call.1} parent=1 // pred_check
      _
    $region15: #{tpu_custom_call.1} parent=1 // pred_check_branch
      %25 = sbr.rel (0) target = $region17
    $region16: #{tpu_custom_call.1} parent=1 // pred_region
      %s27 = ssub.s32 1024, 1024
      %28 = vsyncadd [#allocation4], %s27
      %s29 = sshll.u32 [#allocation3], 4
      %s30 = int_to_ptr.vmem [resolvable:$true] %s29
      %35 = dma.hbm_to_vmem [thread:$0]  %s3, 1024, %s30, [#allocation4], 64, 64, 4
    $region17: #{tpu_custom_call.1} parent=1 // pred_fallthru
      _
    // Predicated region
    $region18: #{tpu_custom_call.1} parent=1 // pred_check
      _
    $region19: #{tpu_custom_call.1} parent=1 // pred_check_branch
      %37 = sbr.rel (0) target = $region21
    $region20: #{tpu_custom_call.1} parent=1 // pred_region
      _
    $region21: #{tpu_custom_call.1} parent=1 // pred_fallthru
      _
    // Predicated region
    $region22: #{tpu_custom_call.1} parent=1 // pred_check
      _
    $region23: #{tpu_custom_call.1} parent=1 // pred_check_branch
      %39 = sbr.rel (0) target = $region25
    $region24: #{tpu_custom_call.1} parent=1 // pred_region
      %s41 = ssub.s32 1024, 1024
      %42 = vsyncadd [#allocation6], %s41
      %s43 = sshll.u32 [#allocation5], 4
      %s44 = int_to_ptr.vmem [resolvable:$true] %s43
      %49 = dma.hbm_to_vmem [thread:$0]  %s5, 1024, %s44, [#allocation6], 64, 64, 4
    $region25: #{tpu_custom_call.1} parent=1 // pred_fallthru
      _
    // Predicated region
    $region26: #{tpu_custom_call.1} parent=1 // pred_check
      _
    $region27: #{tpu_custom_call.1} parent=1 // pred_check_branch
      %51 = sbr.rel (0) target = $region29
    $region28: #{tpu_custom_call.1} parent=1 // pred_region
      _
    $region29: #{tpu_custom_call.1} parent=1 // pred_fallthru
      _
    // Predicated region
    $region30: #{tpu_custom_call.1} parent=1 // pred_check
      _
    $region31: #{tpu_custom_call.1} parent=1 // pred_check_branch
      %53 = sbr.rel (0) target = $region33
    $region32: #{tpu_custom_call.1} parent=1 // pred_region
      _
    $region33: #{tpu_custom_call.1} parent=1 // pred_fallthru
      _
    // Predicated region
    $region34: #{tpu_custom_call.1} parent=1 // pred_check
      _
    $region35: #{tpu_custom_call.1} parent=1 // pred_check_branch
      %55 = sbr.rel (0) target = $region37
    $region36: #{tpu_custom_call.1} parent=1 // pred_region
      _
    $region37: #{tpu_custom_call.1} parent=1 // pred_fallthru
      _
    // Predicated region
    $region38: #{tpu_custom_call.1} parent=1 // pred_check
      _
    $region39: #{tpu_custom_call.1} parent=1 // pred_check_branch
      %57 = sbr.rel (0) target = $region41
    $region40: #{tpu_custom_call.1} parent=1 // pred_region
      %58 = dma.done [#allocation4], 1024
    $region41: #{tpu_custom_call.1} parent=1 // pred_fallthru
      _
    // Predicated region
    $region42: #{tpu_custom_call.1} parent=1 // pred_check
      _
    $region43: #{tpu_custom_call.1} parent=1 // pred_check_branch
      %60 = sbr.rel (0) target = $region45
    $region44: #{tpu_custom_call.1} parent=1 // pred_region
      %61 = dma.done [#allocation6], 1024
    $region45: #{tpu_custom_call.1} parent=1 // pred_fallthru
      _
    %v63 = vld [vmem:[%s0] sm:$0xf]
    %v64 = vld [vmem:[%s0 + $0x4] sm:$0xf]
    %v65 = vld [vmem:[%s0 + $0x8] sm:$0xf]
    %v66 = vld [vmem:[%s0 + $0xc] sm:$0xf]
    %v67 = vld [vmem:[%s0 + $0x10] sm:$0xf]
    %v68 = vld [vmem:[%s0 + $0x14] sm:$0xf]
    %v69 = vld [vmem:[%s1] sm:$0xf]
    %v70 = vld [vmem:[%s1 + $0x4] sm:$0xf]
    %v71 = vld [vmem:[%s2] sm:$0x1]
    %v73 = vlaneseq
    %v74 = vshrl.u32 %v73, 7
    %v75 = vsub.s32 0, %v74
    %v76 = vrot.slane %v71, %v75
    %v84 = vunpack.c.l.b16 %v63
    %v85 = vunpack.c.l.b16 %v64
    %v86 = vunpack.c.l.b16 %v65
    %v87 = vunpack.c.l.b16 %v66
    %v88 = vunpack.c.l.b16 %v67
    %v89 = vunpack.c.l.b16 %v68
    %v90 = vpack.c.b16 %v85, %v84
    %v91 = vpack.c.b16 %v87, %v86
    %v92 = vpack.c.b16 %v89, %v88
    %v95 = vunpack.c.l.b16 %v69
    %v96 = vunpack.c.l.b16 %v70
    %v97 = vpack.c.b16 %v96, %v95
    %vm99 = vcmask 130048
    %v101 = vsel %vm99, %v90, 0
    %v104 = vsel %vm99, %v91, 0
    %v107 = vsel %vm99, %v92, 0
    %109 = vmatprep.subr.bf16.mxu0 0
    %110 = vmatpush1.bf16.msra.mxu0 %v97
    %111 = vmatprep.subr.bf16.mxu0 0
    %112 = vmatpush1.bf16.msra.mxu0 0
    %113 = vmatprep.subr.bf16.mxu0 0
    %114 = vmatpush1.bf16.msra.mxu0 0
    %115 = vmatprep.subr.bf16.mxu0 0
    %116 = vmatpush1.bf16.msra.mxu0 0
    %117 = vmatprep.subr.bf16.mxu0 0
    %118 = vmatpush1.bf16.msra.mxu0 0
    %119 = vmatprep.subr.bf16.mxu0 0
    %120 = vmatpush1.bf16.msra.mxu0 0
    %121 = vmatprep.subr.bf16.mxu0 0
    %122 = vmatpush1.bf16.msra.mxu0 0
    %123 = vmatprep.subr.bf16.mxu0 0
    %124 = vmatpush1.bf16.msra.mxu0 0
    %125 = vmatprep.subr.bf16.mxu0 0
    %126 = vmatpush1.bf16.msra.mxu0 0
    %127 = vmatprep.subr.bf16.mxu0 0
    %128 = vmatpush1.bf16.msra.mxu0 0
    %129 = vmatprep.subr.bf16.mxu0 0
    %130 = vmatpush1.bf16.msra.mxu0 0
    %131 = vmatprep.subr.bf16.mxu0 0
    %132 = vmatpush1.bf16.msra.mxu0 0
    %133 = vmatprep.subr.bf16.mxu0 0
    %134 = vmatpush1.bf16.msra.mxu0 0
    %135 = vmatprep.subr.bf16.mxu0 0
    %136 = vmatpush1.bf16.msra.mxu0 0
    %137 = vmatprep.subr.bf16.mxu0 0
    %138 = vmatpush1.bf16.msra.mxu0 0
    %139 = vmatprep.subr.bf16.mxu0 0
    %140 = vmatpush1.bf16.msra.mxu0 0
    %141 = vmatprep.mubr.bf16.mxu0 0
    %142 = vmatmul.mubr.bf16.gmra.mrb[0].mxu0 %v101
    %v143 = vpop.f32.mrb[0].mxu0
    %v144 = vadd.f32 %v76, %v143
    %v145 = vpop.f32.mrb[0].mxu0
    %v146 = vpop.f32.mrb[0].mxu0
    %v147 = vadd.f32 %v76, %v146
    %v148 = vpop.f32.mrb[0].mxu0
    %149 = vmatprep.mubr.bf16.mxu0 0
    %150 = vmatmul.mubr.bf16.gmra.mrb[0].mxu0 %v104
    %v151 = vpop.f32.mrb[0].mxu0
    %v152 = vadd.f32 %v76, %v151
    %v153 = vpop.f32.mrb[0].mxu0
    %v154 = vpop.f32.mrb[0].mxu0
    %v155 = vadd.f32 %v76, %v154
    %v156 = vpop.f32.mrb[0].mxu0
    %157 = vmatprep.mubr.bf16.mxu0 0
    %158 = vmatmul.mubr.bf16.gmra.mrb[0].mxu0 %v107
    %v159 = vpop.f32.mrb[0].mxu0
    %v160 = vadd.f32 %v76, %v159
    %v161 = vpop.f32.mrb[0].mxu0
    %v162 = vpop.f32.mrb[0].mxu0
    %v163 = vadd.f32 %v76, %v162
    %v164 = vpop.f32.mrb[0].mxu0
    %165 = vdwg.mxu0
    %v166 = vmax.f32 %v144, 0.0
    %v167 = vmax.f32 %v147, 0.0
    %v168 = vmax.f32 %v152, 0.0
    %v169 = vmax.f32 %v155, 0.0
    %v170 = vmax.f32 %v160, 0.0
    %v171 = vmax.f32 %v163, 0.0
    %v172 = vpack.c.bf16 %v167, %v166
    %v173 = vpack.c.bf16 %v169, %v168
    %v174 = vpack.c.bf16 %v171, %v170
    %v175 = vld [vmem:[#allocation3] sm:$0xf]
    %v176 = vld [vmem:[#allocation3 + $0x4] sm:$0xf]
    %v177 = vld [vmem:[#allocation3 + $0x8] sm:$0xf]
    %v178 = vld [vmem:[#allocation3 + $0xc] sm:$0xf]
    %v179 = vld [vmem:[#allocation3 + $0x10] sm:$0xf]
    %v180 = vld [vmem:[#allocation3 + $0x14] sm:$0xf]
    %v181 = vld [vmem:[#allocation3 + $0x18] sm:$0xf]
    %v182 = vld [vmem:[#allocation3 + $0x1c] sm:$0xf]
    %v183 = vld [vmem:[#allocation3 + $0x20] sm:$0xf]
    %v184 = vld [vmem:[#allocation3 + $0x24] sm:$0xf]
    %v185 = vld [vmem:[#allocation3 + $0x28] sm:$0xf]
    %v186 = vld [vmem:[#allocation3 + $0x2c] sm:$0xf]
    %v187 = vld [vmem:[#allocation3 + $0x30] sm:$0xf]
    %v188 = vld [vmem:[#allocation3 + $0x34] sm:$0xf]
    %v189 = vld [vmem:[#allocation3 + $0x38] sm:$0xf]
    %v190 = vld [vmem:[#allocation3 + $0x3c] sm:$0xf]
    %v191 = vld [vmem:[%s4] sm:$0x1]
    %v193 = vlaneseq
    %v194 = vshrl.u32 %v193, 7
    %v195 = vsub.s32 0, %v194
    %v196 = vrot.slane %v191, %v195
    %v214 = vunpack.c.l.b16 %v175
    %v215 = vunpack.c.l.b16 %v176
    %v216 = vunpack.c.l.b16 %v177
    %v217 = vunpack.c.l.b16 %v178
    %v218 = vunpack.c.l.b16 %v179
    %v219 = vunpack.c.l.b16 %v180
    %v220 = vunpack.c.l.b16 %v181
    %v221 = vunpack.c.l.b16 %v182
    %v222 = vunpack.c.l.b16 %v183
    %v223 = vunpack.c.l.b16 %v184
    %v224 = vunpack.c.l.b16 %v185
    %v225 = vunpack.c.l.b16 %v186
    %v226 = vunpack.c.l.b16 %v187
    %v227 = vunpack.c.l.b16 %v188
    %v228 = vunpack.c.l.b16 %v189
    %v229 = vunpack.c.l.b16 %v190
    %v230 = vpack.c.b16 %v215, %v214
    %v231 = vpack.c.b16 %v217, %v216
    %v232 = vpack.c.b16 %v219, %v218
    %v233 = vpack.c.b16 %v221, %v220
    %v234 = vpack.c.b16 %v223, %v222
    %v235 = vpack.c.b16 %v225, %v224
    %v236 = vpack.c.b16 %v227, %v226
    %v237 = vpack.c.b16 %v229, %v228
    %246 = vmatprep.subr.bf16.mxu0 0
    %247 = vmatpush1.bf16.msra.mxu0 %v230
    %248 = vmatprep.subr.bf16.mxu0 0
    %249 = vmatpush1.bf16.msra.mxu0 %v231
    %250 = vmatprep.subr.bf16.mxu0 0
    %251 = vmatpush1.bf16.msra.mxu0 %v232
    %252 = vmatprep.subr.bf16.mxu0 0
    %253 = vmatpush1.bf16.msra.mxu0 %v233
    %254 = vmatprep.subr.bf16.mxu0 0
    %255 = vmatpush1.bf16.msra.mxu0 %v234
    %256 = vmatprep.subr.bf16.mxu0 0
    %257 = vmatpush1.bf16.msra.mxu0 %v235
    %258 = vmatprep.subr.bf16.mxu0 0
    %259 = vmatpush1.bf16.msra.mxu0 %v236
    %260 = vmatprep.subr.bf16.mxu0 0
    %261 = vmatpush1.bf16.msra.mxu0 %v237
    %262 = vmatprep.subr.bf16.mxu0 0
    %263 = vmatpush1.bf16.msra.mxu0 0
    %264 = vmatprep.subr.bf16.mxu0 0
    %265 = vmatpush1.bf16.msra.mxu0 0
    %266 = vmatprep.subr.bf16.mxu0 0
    %267 = vmatpush1.bf16.msra.mxu0 0
    %268 = vmatprep.subr.bf16.mxu0 0
    %269 = vmatpush1.bf16.msra.mxu0 0
    %270 = vmatprep.subr.bf16.mxu0 0
    %271 = vmatpush1.bf16.msra.mxu0 0
    %272 = vmatprep.subr.bf16.mxu0 0
    %273 = vmatpush1.bf16.msra.mxu0 0
    %274 = vmatprep.subr.bf16.mxu0 0
    %275 = vmatpush1.bf16.msra.mxu0 0
    %276 = vmatprep.subr.bf16.mxu0 0
    %277 = vmatpush1.bf16.msra.mxu0 0
    %278 = vmatprep.mubr.bf16.mxu0 0
    %279 = vmatmul.mubr.bf16.gmra.mrb[0].mxu0 %v172
    %v280 = vpop.f32.mrb[0].mxu0
    %v281 = vadd.f32 %v196, %v280
    %v282 = vpop.f32.mrb[0].mxu0
    %v283 = vpop.f32.mrb[0].mxu0
    %v284 = vadd.f32 %v196, %v283
    %v285 = vpop.f32.mrb[0].mxu0
    %286 = vmatprep.mubr.bf16.mxu0 0
    %287 = vmatmul.mubr.bf16.gmra.mrb[0].mxu0 %v173
    %v288 = vpop.f32.mrb[0].mxu0
    %v289 = vadd.f32 %v196, %v288
    %v290 = vpop.f32.mrb[0].mxu0
    %v291 = vpop.f32.mrb[0].mxu0
    %v292 = vadd.f32 %v196, %v291
    %v293 = vpop.f32.mrb[0].mxu0
    %294 = vmatprep.mubr.bf16.mxu0 0
    %295 = vmatmul.mubr.bf16.gmra.mrb[0].mxu0 %v174
    %v296 = vpop.f32.mrb[0].mxu0
    %v297 = vadd.f32 %v196, %v296
    %v298 = vpop.f32.mrb[0].mxu0
    %v299 = vpop.f32.mrb[0].mxu0
    %v300 = vadd.f32 %v196, %v299
    %v301 = vpop.f32.mrb[0].mxu0
    %302 = vdwg.mxu0
    %v303 = vmax.f32 %v281, 0.0
    %v304 = vmax.f32 %v284, 0.0
    %v305 = vmax.f32 %v289, 0.0
    %v306 = vmax.f32 %v292, 0.0
    %v307 = vmax.f32 %v297, 0.0
    %v308 = vmax.f32 %v300, 0.0
    %v309 = vpack.c.bf16 %v304, %v303
    %v310 = vpack.c.bf16 %v306, %v305
    %v311 = vpack.c.bf16 %v308, %v307
    %v312 = vld [vmem:[#allocation5] sm:$0xf]
    %v313 = vld [vmem:[#allocation5 + $0x4] sm:$0xf]
    %v314 = vld [vmem:[#allocation5 + $0x8] sm:$0xf]
    %v315 = vld [vmem:[#allocation5 + $0xc] sm:$0xf]
    %v316 = vld [vmem:[#allocation5 + $0x10] sm:$0xf]
    %v317 = vld [vmem:[#allocation5 + $0x14] sm:$0xf]
    %v318 = vld [vmem:[#allocation5 + $0x18] sm:$0xf]
    %v319 = vld [vmem:[#allocation5 + $0x1c] sm:$0xf]
    %v320 = vld [vmem:[#allocation5 + $0x20] sm:$0xf]
    %v321 = vld [vmem:[#allocation5 + $0x24] sm:$0xf]
    %v322 = vld [vmem:[#allocation5 + $0x28] sm:$0xf]
    %v323 = vld [vmem:[#allocation5 + $0x2c] sm:$0xf]
    %v324 = vld [vmem:[#allocation5 + $0x30] sm:$0xf]
    %v325 = vld [vmem:[#allocation5 + $0x34] sm:$0xf]
    %v326 = vld [vmem:[#allocation5 + $0x38] sm:$0xf]
    %v327 = vld [vmem:[#allocation5 + $0x3c] sm:$0xf]
    %v328 = vld [vmem:[%s6] sm:$0x1]
    %v330 = vlaneseq
    %v331 = vshrl.u32 %v330, 7
    %v332 = vsub.s32 0, %v331
    %v333 = vrot.slane %v328, %v332
    %v351 = vunpack.c.l.b16 %v312
    %v352 = vunpack.c.l.b16 %v313
    %v353 = vunpack.c.l.b16 %v314
    %v354 = vunpack.c.l.b16 %v315
    %v355 = vunpack.c.l.b16 %v316
    %v356 = vunpack.c.l.b16 %v317
    %v357 = vunpack.c.l.b16 %v318
    %v358 = vunpack.c.l.b16 %v319
    %v359 = vunpack.c.l.b16 %v320
    %v360 = vunpack.c.l.b16 %v321
    %v361 = vunpack.c.l.b16 %v322
    %v362 = vunpack.c.l.b16 %v323
    %v363 = vunpack.c.l.b16 %v324
    %v364 = vunpack.c.l.b16 %v325
    %v365 = vunpack.c.l.b16 %v326
    %v366 = vunpack.c.l.b16 %v327
    %v367 = vpack.c.b16 %v352, %v351
    %v368 = vpack.c.b16 %v354, %v353
    %v369 = vpack.c.b16 %v356, %v355
    %v370 = vpack.c.b16 %v358, %v357
    %v371 = vpack.c.b16 %v360, %v359
    %v372 = vpack.c.b16 %v362, %v361
    %v373 = vpack.c.b16 %v364, %v363
    %v374 = vpack.c.b16 %v366, %v365
    %383 = vmatprep.subr.bf16.mxu0 0
    %384 = vmatpush1.bf16.msra.mxu0 %v367
    %385 = vmatprep.subr.bf16.mxu0 0
    %386 = vmatpush1.bf16.msra.mxu0 %v368
    %387 = vmatprep.subr.bf16.mxu0 0
    %388 = vmatpush1.bf16.msra.mxu0 %v369
    %389 = vmatprep.subr.bf16.mxu0 0
    %390 = vmatpush1.bf16.msra.mxu0 %v370
    %391 = vmatprep.subr.bf16.mxu0 0
    %392 = vmatpush1.bf16.msra.mxu0 %v371
    %393 = vmatprep.subr.bf16.mxu0 0
    %394 = vmatpush1.bf16.msra.mxu0 %v372
    %395 = vmatprep.subr.bf16.mxu0 0
    %396 = vmatpush1.bf16.msra.mxu0 %v373
    %397 = vmatprep.subr.bf16.mxu0 0
    %398 = vmatpush1.bf16.msra.mxu0 %v374
    %399 = vmatprep.subr.bf16.mxu0 0
    %400 = vmatpush1.bf16.msra.mxu0 0
    %401 = vmatprep.subr.bf16.mxu0 0
    %402 = vmatpush1.bf16.msra.mxu0 0
    %403 = vmatprep.subr.bf16.mxu0 0
    %404 = vmatpush1.bf16.msra.mxu0 0
    %405 = vmatprep.subr.bf16.mxu0 0
    %406 = vmatpush1.bf16.msra.mxu0 0
    %407 = vmatprep.subr.bf16.mxu0 0
    %408 = vmatpush1.bf16.msra.mxu0 0
    %409 = vmatprep.subr.bf16.mxu0 0
    %410 = vmatpush1.bf16.msra.mxu0 0
    %411 = vmatprep.subr.bf16.mxu0 0
    %412 = vmatpush1.bf16.msra.mxu0 0
    %413 = vmatprep.subr.bf16.mxu0 0
    %414 = vmatpush1.bf16.msra.mxu0 0
    %415 = vmatprep.mubr.bf16.mxu0 0
    %416 = vmatmul.mubr.bf16.gmra.mrb[0].mxu0 %v309
    %v417 = vpop.f32.mrb[0].mxu0
    %v418 = vadd.f32 %v333, %v417
    %v419 = vpop.f32.mrb[0].mxu0
    %v420 = vpop.f32.mrb[0].mxu0
    %v421 = vadd.f32 %v333, %v420
    %v422 = vpop.f32.mrb[0].mxu0
    %423 = vmatprep.mubr.bf16.mxu0 0
    %424 = vmatmul.mubr.bf16.gmra.mrb[0].mxu0 %v310
    %v425 = vpop.f32.mrb[0].mxu0
    %v426 = vadd.f32 %v333, %v425
    %v427 = vpop.f32.mrb[0].mxu0
    %v428 = vpop.f32.mrb[0].mxu0
    %v429 = vadd.f32 %v333, %v428
    %v430 = vpop.f32.mrb[0].mxu0
    %431 = vmatprep.mubr.bf16.mxu0 0
    %432 = vmatmul.mubr.bf16.gmra.mrb[0].mxu0 %v311
    %v433 = vpop.f32.mrb[0].mxu0
    %v434 = vadd.f32 %v333, %v433
    %v435 = vpop.f32.mrb[0].mxu0
    %v436 = vpop.f32.mrb[0].mxu0
    %v437 = vadd.f32 %v333, %v436
    %v438 = vpop.f32.mrb[0].mxu0
    %439 = vdwg.mxu0
    %v440 = vmax.f32 %v418, 0.0
    %v441 = vmax.f32 %v421, 0.0
    %v442 = vmax.f32 %v426, 0.0
    %v443 = vmax.f32 %v429, 0.0
    %v444 = vmax.f32 %v434, 0.0
    %v445 = vmax.f32 %v437, 0.0
    %v446 = vld [vmem:[%s7] sm:$0x1]
    %v448 = vlaneseq
    %v449 = vshrl.u32 %v448, 7
    %v450 = vsub.s32 0, %v449
    %v451 = vrot.slane %v446, %v450
    %v453 = vmul.f32 %v440, %v451
    %v454 = vmul.f32 %v441, %v451
    %v455 = vmul.f32 %v442, %v451
    %v456 = vmul.f32 %v443, %v451
    %v457 = vmul.f32 %v444, %v451
    %v458 = vmul.f32 %v445, %v451
    %459 = vadd.xlane.f32.xlu0 %v453
    %v460 = vpop.xlane.xlu0 %459
    %461 = vadd.xlane.f32.xlu0 %v454
    %v462 = vpop.xlane.xlu0 %461
    %463 = vadd.xlane.f32.xlu0 %v455
    %v464 = vpop.xlane.xlu0 %463
    %465 = vadd.xlane.f32.xlu0 %v456
    %v466 = vpop.xlane.xlu0 %465
    %467 = vadd.xlane.f32.xlu0 %v457
    %v468 = vpop.xlane.xlu0 %467
    %469 = vadd.xlane.f32.xlu0 %v458
    %v470 = vpop.xlane.xlu0 %469
    %v471 = vld [vmem:[#allocation2] sm:$0x1]
    %v473 = vlaneseq
    %v474 = vshrl.u32 %v473, 7
    %v475 = vsub.s32 0, %v474
    %v476 = vrot.slane %v471, %v475
    %v478 = vadd.f32 %v460, %v476
    %v479 = vadd.f32 %v462, %v476
    %v480 = vadd.f32 %v464, %v476
    %v481 = vadd.f32 %v466, %v476
    %v482 = vadd.f32 %v468, %v476
    %v483 = vadd.f32 %v470, %v476
    %vm484 = vcmask 7168
    %485 = vst.msk [vmem:[%s9] sm:$0xff] %vm484, %v478
    %486 = vst.msk [vmem:[%s9 + $0x8] sm:$0xff] %vm484, %v479
    %487 = vst.msk [vmem:[%s9 + $0x10] sm:$0xff] %vm484, %v480
    %488 = vst.msk [vmem:[%s9 + $0x18] sm:$0xff] %vm484, %v481
    %489 = vst.msk [vmem:[%s9 + $0x20] sm:$0xff] %vm484, %v482
    %490 = vst.msk [vmem:[%s9 + $0x28] sm:$0xff] %vm484, %v483
    // Predicated region
    $region46: #{tpu_custom_call.1} parent=1 // pred_check
      _
    $region47: #{tpu_custom_call.1} parent=1 // pred_check_branch
      %492 = sbr.rel (0) target = $region49
    $region48: #{tpu_custom_call.1} parent=1 // pred_region
      _
    $region49: #{tpu_custom_call.1} parent=1 // pred_fallthru
      _
    // Predicated region
    $region50: #{tpu_custom_call.1} parent=1 // pred_check
      _
    $region51: #{tpu_custom_call.1} parent=1 // pred_check_branch
      %494 = sbr.rel (0) target = $region53
    $region52: #{tpu_custom_call.1} parent=1 // pred_region
      _
    $region53: #{tpu_custom_call.1} parent=1 // pred_fallthru
      _
    %495 = vsyncpa [#allocation4], 1
    %496 = vsyncpa [#allocation6], 1

</llo_original>
